<compile_context>
chip_gen: v7x
topology: tpu7x:2x2x1
jax: 0.10.0
libtpu: 0.0.40
codegen_flags: <defaults>
</compile_context>

<pallas_src>
import jax
import jax.numpy as jnp
from jax import lax
from jax.experimental import pallas as pl
from jax.experimental.pallas import tpu as pltpu


def _round_up(a: int, b: int) -> int:
    return ((a + b - 1) // b) * b


def _vmem_capacity_bytes() -> int:
    try:
        return int(pltpu.get_tpu_info().vmem_capacity_bytes)
    except Exception:
        return 64 * 1024 * 1024  # conservative (v7x per-TensorCore)


def fast_lora_kernel(x_ref, wd_ref, wu_ref, o_ref):
    # Grid = (batch tiles i, output tiles j), both "parallel".
    # The down projection is intentionally recomputed per output tile: it is a
    # few MFLOPs in a memory-bound kernel (free filler under the HBM streams)
    # and removing the cross-j carry lets both grid axes be megacore-sharded.
    # down: [tm, H] x [L, H] contracted over H -> [tm, L], f32 accumulation.
    inter = lax.dot_general(
        x_ref[...], wd_ref[...],
        dimension_numbers=(((1,), (1,)), ((), ())),
        preferred_element_type=jnp.float32)
    # Single tiny (tm x L) cast to the weight dtype, then
    # up: [tm, L] x [tn, L] contracted over L -> [tm, tn].
    o_ref[...] = lax.dot_general(
        inter.astype(wu_ref.dtype), wu_ref[...],
        dimension_numbers=(((1,), (1,)), ((), ())),
        preferred_element_type=jnp.float32).astype(o_ref.dtype)


def prepare_lora_weights(down_weight, up_weight, *, compute_dtype=None):
    """One-time (load-time) weight preparation -- kept OFF the per-call path.

    * Optional dtype cast (e.g. bf16 on v5e to halve HBM weight traffic).
    * Pads the intermediate rows of up_weight to a multiple of 128 so output
      stores are lane-dense and no padding happens per call.
    Returns (down_weight, up_weight_padded, intermediate_size).
    """
    I, L = up_weight.shape
    L2, _H = down_weight.shape
    assert L == L2
    if compute_dtype is not None:
        down_weight = down_weight.astype(compute_dtype)
        up_weight = up_weight.astype(compute_dtype)
    I_pad = _round_up(I, 128)
    if I_pad != I:
        up_weight = jnp.pad(up_weight, ((0, I_pad - I), (0, 0)))
    return down_weight, up_weight, I


def fast_lora_projection(x, down_weight, up_weight, *,
                         intermediate_size=None,
                         batch_tile=None, out_tile=None,
                         out_dtype=None):
    """output = (x @ down_weight.T) @ up_weight.T

    x:           [B, H]
    down_weight: [L, H]        (prepared once via prepare_lora_weights)
    up_weight:   [I_pad, L]    (rows padded to a multiple of 128 at load time)
    returns:     [B, intermediate_size] in out_dtype (default: x.dtype)
    """
    B, H = x.shape
    L, H2 = down_weight.shape
    I_tot, L2 = up_weight.shape
    assert H == H2 and L == L2

    if intermediate_size is None:
        intermediate_size = I_tot
    if out_dtype is None:
        out_dtype = x.dtype

    if I_tot % 128 != 0:
        # TODO(synk): fallback only -- call prepare_lora_weights() once at
        # weight-load time so this per-call pad never runs in production.
        pad = _round_up(I_tot, 128) - I_tot
        up_weight = jnp.pad(up_weight, ((0, pad), (0, 0)))
        I_tot += pad

    # Activations follow the (static) weight dtype; casting x is cheap (B x H,
    # the smallest stream), casting weights per call is not.
    if x.dtype != down_weight.dtype:
        x = x.astype(down_weight.dtype)

    # ---- per-chip tile selection & VMEM budget ---------------------------
    cap = _vmem_capacity_bytes()
    budget = int(cap * 0.8)
    small_vmem = cap < 100 * 1024 * 1024          # v7x (64 MiB / TC)
    if batch_tile is None:
        batch_tile = 128 if small_vmem else 256
    if out_tile is None:
        out_tile = 1024 if small_vmem else 4096

    x_item = jnp.dtype(x.dtype).itemsize
    wd_item = jnp.dtype(down_weight.dtype).itemsize
    wu_item = jnp.dtype(up_weight.dtype).itemsize
    out_item = jnp.dtype(out_dtype).itemsize

    # bf16 tiles want sublane multiples of 16; f32 wants 8.
    granule = 16 if min(x_item, out_item) <= 2 else 8
    tm = _round_up(max(1, min(batch_tile, B)), granule)

    # VMEM accounting uses lane/sublane-padded layouts (what VMEM actually
    # holds), while HBM/DMA traffic keeps the real, unpadded L.
    H_vmem = _round_up(H, 128)
    L_vmem = _round_up(L, 128)
    wd_bytes = 2 * _round_up(L, 8) * H_vmem * wd_item      # resident weight

    # TODO(synk): pipeline_mode=pl.Buffered(1) on the down-weight / x specs
    # would reclaim their redundant second buffer on v7x once the top-level
    # pallas_call pipeline honors it.
    def x_bytes(tm_):
        return 2 * tm_ * H_vmem * x_item

    while tm > granule and x_bytes(tm) + wd_bytes > budget // 2:
        tm = max(granule, _round_up(tm // 2, granule))

    fixed = x_bytes(tm) + wd_bytes
    per_tn = 2 * (L_vmem * wu_item + tm * out_item)         # bytes per out col
    tn_limit = max(128, ((budget - fixed) // per_tn) // 128 * 128)
    target = max(128, min((max(out_tile, 128) // 128) * 128, tn_limit, I_tot))
    tn = (target // 128) * 128
    while I_tot % tn != 0:        # exact tiling -> no ragged / masked blocks
        tn -= 128

    vmem_needed = fixed + tn * per_tn
    vmem_limit = int(min(cap, max(vmem_needed + (8 << 20), 32 << 20)))

    B_pad = _round_up(B, tm)
    if B_pad != B:
        x = jnp.pad(x, ((0, B_pad - B), (0, 0)))

    grid = (B_pad // tm, I_tot // tn)

    out = pl.pallas_call(
        fast_lora_kernel,
        out_shape=jax.ShapeDtypeStruct((B_pad, I_tot), out_dtype),
        grid_spec=pltpu.PrefetchScalarGridSpec(
            num_scalar_prefetch=0,
            grid=grid,
            in_specs=[
                # x tile depends only on i -> fetched once per batch tile.
                pl.BlockSpec((tm, H), lambda i, j: (i, 0)),
                # full down weight (real rank L), resident across the grid.
                pl.BlockSpec((L, H), lambda i, j: (0, 0)),
                # up-weight tile along the intermediate dim, real rank L.
                pl.BlockSpec((tn, L), lambda i, j: (j, 0)),
            ],
            out_specs=pl.BlockSpec((tm, tn), lambda i, j: (i, j)),
        ),
        compiler_params=pltpu.CompilerParams(
            dimension_semantics=("parallel", "parallel"),
            vmem_limit_bytes=vmem_limit),
    )(x, down_weight, up_weight)

    if B_pad != B or I_tot != intermediate_size:
        out = out[:B, :intermediate_size]
    return out


if __name__ == "__main__":
    key = jax.random.PRNGKey(0)
    ks = jax.random.split(key, 9)

    # --- Test 1: small module-like shapes (f32) ----------------------------
    B, H, I, L = 8, 32, 64, 16
    x = jax.random.normal(ks[0], (B, H), dtype=jnp.float32)
    down_w = jax.random.uniform(ks[1], (L, H), dtype=jnp.float32,
                                minval=-1.0 / H ** 0.5, maxval=1.0 / H ** 0.5)
    up_w = jax.random.uniform(ks[2], (I, L), dtype=jnp.float32,
                              minval=-1.0 / L ** 0.5, maxval=1.0 / L ** 0.5)
    dwp, uwp, isz = prepare_lora_weights(down_w, up_w)
    out = jax.block_until_ready(
        fast_lora_projection(x, dwp, uwp, intermediate_size=isz))
    ref = (x @ down_w.T) @ up_w.T
    assert out.shape == (B, I) and out.dtype == x.dtype
    assert jnp.allclose(out, ref, atol=1e-3, rtol=1e-3)

    # --- Test 2: ragged shapes exercising batch/output tiling + padding ----
    B, H, I, L = 20, 96, 320, 24
    x = jax.random.normal(ks[3], (B, H), dtype=jnp.float32)
    down_w = jax.random.uniform(ks[4], (L, H), dtype=jnp.float32,
                                minval=-1.0 / H ** 0.5, maxval=1.0 / H ** 0.5)
    up_w = jax.random.uniform(ks[5], (I, L), dtype=jnp.float32,
                              minval=-1.0 / L ** 0.5, maxval=1.0 / L ** 0.5)
    dwp, uwp, isz = prepare_lora_weights(down_w, up_w)
    out = jax.block_until_ready(
        fast_lora_projection(x, dwp, uwp, intermediate_size=isz,
                             batch_tile=8, out_tile=128))
    ref = (x @ down_w.T) @ up_w.T
    assert out.shape == (B, I)
    assert jnp.allclose(out, ref, atol=1e-3, rtol=1e-3)

    # --- Test 3: bf16 weight path (v5e recipe), f32 activations/output -----
    B, H, I, L = 16, 64, 256, 32
    x = jax.random.normal(ks[6], (B, H), dtype=jnp.float32)
    down_w = jax.random.uniform(ks[7], (L, H), dtype=jnp.float32,
                                minval=-1.0 / H ** 0.5, maxval=1.0 / H ** 0.5)
    up_w = jax.random.uniform(ks[8], (I, L), dtype=jnp.float32,
                              minval=-1.0 / L ** 0.5, maxval=1.0 / L ** 0.5)
    dwp, uwp, isz = prepare_lora_weights(down_w, up_w,
                                         compute_dtype=jnp.bfloat16)
    out = jax.block_until_ready(
        fast_lora_projection(x, dwp, uwp, intermediate_size=isz))
    xb = x.astype(jnp.bfloat16).astype(jnp.float32)
    inter = xb @ dwp.astype(jnp.float32).T
    ref = inter.astype(jnp.bfloat16).astype(jnp.float32) @ uwp.astype(jnp.float32).T
    assert out.shape == (B, I) and out.dtype == jnp.float32
    assert jnp.allclose(out, ref[:, :I], atol=1e-2, rtol=1e-2)

    print("KERNEL_OK")
</pallas_src>

<mosaic_0001>
module attributes {stable_mosaic.version = 11 : i64} {
  func.func @fast_lora_kernel(%arg0: i32, %arg1: i32, %arg2: memref<8x32xf32, #tpu.memory_space<vmem>>, %arg3: memref<16x32xf32, #tpu.memory_space<vmem>>, %arg4: memref<128x16xf32, #tpu.memory_space<vmem>>, %arg5: memref<8x128xf32, #tpu.memory_space<vmem>>) attributes {dimension_semantics = [#tpu.dimension_semantics<parallel>, #tpu.dimension_semantics<parallel>], iteration_bounds = array<i64: 1, 1>, scalar_prefetch = 0 : i64, scratch_operands = 0 : i64, tpu.core_type = #tpu.core_type<tc>, window_params = [{transform_indices = @transform_0, window_bounds = array<i64: 8, 32>}, {pipeline_mode = #tpu.pipeline_mode<synchronous>, transform_indices = @transform_1, window_bounds = array<i64: 16, 32>}, {transform_indices = @transform_2, window_bounds = array<i64: 128, 16>}, {transform_indices = @transform_3, window_bounds = array<i64: 8, 128>}]} {
    %c0 = arith.constant 0 : index
    %c0_0 = arith.constant 0 : index
    %0 = vector.load %arg2[%c0, %c0_0] : memref<8x32xf32, #tpu.memory_space<vmem>>, vector<8x32xf32>
    %c0_1 = arith.constant 0 : index
    %c0_2 = arith.constant 0 : index
    %1 = vector.load %arg3[%c0_1, %c0_2] : memref<16x32xf32, #tpu.memory_space<vmem>>, vector<16x32xf32>
    %cst = arith.constant dense<0.000000e+00> : vector<8x16xf32>
    %2 = tpu.matmul %0, %1, %cst {dimension_numbers = #tpu.dot_dimension_numbers<[1], [1], [0], [0], [0, 0, 1, 0], [], []>} : vector<8x32xf32>, vector<16x32xf32>, vector<8x16xf32> -> vector<8x16xf32>
    %c0_3 = arith.constant 0 : index
    %c0_4 = arith.constant 0 : index
    %3 = vector.load %arg4[%c0_3, %c0_4] : memref<128x16xf32, #tpu.memory_space<vmem>>, vector<128x16xf32>
    %cst_5 = arith.constant dense<0.000000e+00> : vector<8x128xf32>
    %4 = tpu.matmul %2, %3, %cst_5 {dimension_numbers = #tpu.dot_dimension_numbers<[1], [1], [0], [0], [0, 0, 1, 0], [], []>} : vector<8x16xf32>, vector<128x16xf32>, vector<8x128xf32> -> vector<8x128xf32>
    %c0_6 = arith.constant 0 : index
    %c0_7 = arith.constant 0 : index
    %5 = vector.load %arg5[%c0_6, %c0_7] : memref<8x128xf32, #tpu.memory_space<vmem>>, vector<8x128xf32>
    tpu.vector_store %arg5[%c0_6, %c0_7], %4 {strides = array<i32>} : memref<8x128xf32, #tpu.memory_space<vmem>>, vector<8x128xf32>,
    return
  }
  func.func @transform_0(%arg0: i32, %arg1: i32) -> (i32, i32) {
    %c0_i32 = arith.constant 0 : i32
    %c0_i32_0 = arith.constant 0 : i32
    return %arg0, %c0_i32 : i32, i32
  }
  func.func @transform_1(%arg0: i32, %arg1: i32) -> (i32, i32) {
    %c0_i32 = arith.constant 0 : i32
    %c0_i32_0 = arith.constant 0 : i32
    %c0_i32_1 = arith.constant 0 : i32
    return %c0_i32, %c0_i32_0 : i32, i32
  }
  func.func @transform_2(%arg0: i32, %arg1: i32) -> (i32, i32) {
    %c0_i32 = arith.constant 0 : i32
    %c0_i32_0 = arith.constant 0 : i32
    return %arg1, %c0_i32 : i32, i32
  }
  func.func @transform_3(%arg0: i32, %arg1: i32) -> (i32, i32) {
    %c0_i32 = arith.constant 0 : i32
    return %arg0, %arg1 : i32, i32
  }
}

</mosaic_0001>

<llo_original>
// kernel: tpu_custom_call.1
$region0: #{tpu_custom_call.1}
  #allocation0 [shape = 'u32[]', space=smem, size = 0x4, offset = 0x4, fixed_abs, tag = 'smem constant byte address 0x4 - core index']
  #allocation1 [shape = 'u32[144,128]{1,0:T(1,128)}', space=vmem, size = 0x12000, scoped, tag = 'internal scratch']
  %s0 = inlined_call_operand.vmem [shape: f32[8,32], index: 0, kind: input, shape index: {}]
  %s1 = inlined_call_operand.vmem [shape: f32[16,32], index: 1, kind: input, shape index: {}]
  %s2 = inlined_call_operand.vmem [shape: f32[128,16], index: 2, kind: input, shape index: {}]
  %s3 = inlined_call_operand.hbm [shape: f32[8,128], index: 3, kind: output, shape index: {}]
  %s4 = sld [smem:[#allocation0]]
  $region22: #{tpu_custom_call.1} parent=0
    _
  %s6 = ssub.s32 1, %s4
  %s7 = scalar_select 0, %s6, %s4
  $region1: #{tpu_custom_call.1} parent=0
    #allocation2 [shape = 'u8[4096]{0}', space=vmem, size = 0x1000, scoped, tag = 'output window, operand 0, single buffered']
    #allocation3 [shape = 's32[1]{0}', space=sflag, size = 0x4, scoped, tag = 'scoped memory for tpu_custom_call.1']
    %8 = vsyncpa [#allocation3], 0
    // Predicated region
    $region2: #{tpu_custom_call.1} parent=1 // pred_check
      _
    $region3: #{tpu_custom_call.1} parent=1 // pred_check_branch
      %10 = sbr.rel (0) target = $region5
    $region4: #{tpu_custom_call.1} parent=1 // pred_region
      _
    $region5: #{tpu_custom_call.1} parent=1 // pred_fallthru
      _
    // Predicated region
    $region6: #{tpu_custom_call.1} parent=1 // pred_check
      _
    $region7: #{tpu_custom_call.1} parent=1 // pred_check_branch
      %12 = sbr.rel (0) target = $region9
    $region8: #{tpu_custom_call.1} parent=1 // pred_region
      _
    $region9: #{tpu_custom_call.1} parent=1 // pred_fallthru
      _
    // Predicated region
    $region10: #{tpu_custom_call.1} parent=1 // pred_check
      _
    $region11: #{tpu_custom_call.1} parent=1 // pred_check_branch
      %14 = sbr.rel (0) target = $region13
    $region12: #{tpu_custom_call.1} parent=1 // pred_region
      _
    $region13: #{tpu_custom_call.1} parent=1 // pred_fallthru
      _
    %v15 = vld [vmem:[%s0] sm:$0xff]
    %v16 = vld [vmem:[%s1] sm:$0xff]
    %v17 = vld [vmem:[%s1 + $0x8] sm:$0xff]
    %vm18 = vcmask 261120
    %v20 = vsel %vm18, %v15, 0
    %v23 = vsel %vm18, %v16, 0
    %v26 = vsel %vm18, %v17, 0
    %28 = vmatprep.subr.mxu0 0.0
    %29 = vmatpush1.xpose.msra.mxu0 %v23
    %30 = vmatprep.subr.mxu0 0.0
    %31 = vmatpush1.xpose.msra.mxu0 %v26
    %32 = vmatprep.subr.mxu0 0.0
    %33 = vmatpush1.xpose.msra.mxu0 0.0
    %34 = vmatprep.subr.mxu0 0.0
    %35 = vmatpush1.xpose.msra.mxu0 0.0
    %36 = vmatprep.subr.mxu0 0.0
    %37 = vmatpush1.xpose.msra.mxu0 0.0
    %38 = vmatprep.subr.mxu0 0.0
    %39 = vmatpush1.xpose.msra.mxu0 0.0
    %40 = vmatprep.subr.mxu0 0.0
    %41 = vmatpush1.xpose.msra.mxu0 0.0
    %42 = vmatprep.subr.mxu0 0.0
    %43 = vmatpush1.xpose.msra.mxu0 0.0
    %44 = vmatprep.subr.mxu0 0.0
    %45 = vmatpush1.xpose.msra.mxu0 0.0
    %46 = vmatprep.subr.mxu0 0.0
    %47 = vmatpush1.xpose.msra.mxu0 0.0
    %48 = vmatprep.subr.mxu0 0.0
    %49 = vmatpush1.xpose.msra.mxu0 0.0
    %50 = vmatprep.subr.mxu0 0.0
    %51 = vmatpush1.xpose.msra.mxu0 0.0
    %52 = vmatprep.subr.mxu0 0.0
    %53 = vmatpush1.xpose.msra.mxu0 0.0
    %54 = vmatprep.subr.mxu0 0.0
    %55 = vmatpush1.xpose.msra.mxu0 0.0
    %56 = vmatprep.subr.mxu0 0.0
    %57 = vmatpush1.xpose.msra.mxu0 0.0
    %58 = vmatprep.subr.mxu0 0.0
    %59 = vmatpush1.xpose.msra.mxu0 0.0
    %60 = vmatprep.subr.mxu0 0.0
    %61 = vmatpush1.xpose.msra.mxu0 0.0
    %62 = vmatprep.subr.mxu0 0.0
    %63 = vmatpush1.xpose.msra.mxu0 0.0
    %64 = vmatprep.subr.mxu0 0.0
    %65 = vmatpush1.xpose.msra.mxu0 0.0
    %66 = vmatprep.subr.mxu0 0.0
    %67 = vmatpush1.xpose.msra.mxu0 0.0
    %68 = vmatprep.subr.mxu0 0.0
    %69 = vmatpush1.xpose.msra.mxu0 0.0
    %70 = vmatprep.subr.mxu0 0.0
    %71 = vmatpush1.xpose.msra.mxu0 0.0
    %72 = vmatprep.subr.mxu0 0.0
    %73 = vmatpush1.xpose.msra.mxu0 0.0
    %74 = vmatprep.subr.mxu0 0.0
    %75 = vmatpush1.xpose.msra.mxu0 0.0
    %76 = vmatprep.subr.mxu0 0.0
    %77 = vmatpush1.xpose.msra.mxu0 0.0
    %78 = vmatprep.subr.mxu0 0.0
    %79 = vmatpush1.xpose.msra.mxu0 0.0
    %80 = vmatprep.subr.mxu0 0.0
    %81 = vmatpush1.xpose.msra.mxu0 0.0
    %82 = vmatprep.subr.mxu0 0.0
    %83 = vmatpush1.xpose.msra.mxu0 0.0
    %84 = vmatprep.subr.mxu0 0.0
    %85 = vmatpush1.xpose.msra.mxu0 0.0
    %86 = vmatprep.subr.mxu0 0.0
    %87 = vmatpush1.xpose.msra.mxu0 0.0
    %88 = vmatprep.subr.mxu0 0.0
    %89 = vmatpush1.xpose.msra.mxu0 0.0
    %90 = vmatprep.subr.mxu0 0.0
    %91 = vmatpush1.xpose.msra.mxu0 0.0
    %92 = vmatprep.mubr.f32.mxu0 0.0
    %93 = vmatmul.mubr.f32.gmra.mrb[0].mxu0 %v20
    %v94 = vpop.f32.mrb[0].mxu0
    %v95 = vadd.f32 0.0, %v94
    %v96 = vpop.f32.mrb[0].mxu0
    %97 = vdwg.mxu0
    %v98 = vld [vmem:[%s2] sm:$0xff]
    %v99 = vld [vmem:[%s2 + $0x8] sm:$0xff]
    %v100 = vld [vmem:[%s2 + $0x10] sm:$0xff]
    %v101 = vld [vmem:[%s2 + $0x18] sm:$0xff]
    %v102 = vld [vmem:[%s2 + $0x20] sm:$0xff]
    %v103 = vld [vmem:[%s2 + $0x28] sm:$0xff]
    %v104 = vld [vmem:[%s2 + $0x30] sm:$0xff]
    %v105 = vld [vmem:[%s2 + $0x38] sm:$0xff]
    %v106 = vld [vmem:[%s2 + $0x40] sm:$0xff]
    %v107 = vld [vmem:[%s2 + $0x48] sm:$0xff]
    %v108 = vld [vmem:[%s2 + $0x50] sm:$0xff]
    %v109 = vld [vmem:[%s2 + $0x58] sm:$0xff]
    %v110 = vld [vmem:[%s2 + $0x60] sm:$0xff]
    %v111 = vld [vmem:[%s2 + $0x68] sm:$0xff]
    %v112 = vld [vmem:[%s2 + $0x70] sm:$0xff]
    %v113 = vld [vmem:[%s2 + $0x78] sm:$0xff]
    %vm114 = vcmask 130048
    %v116 = vsel %vm114, %v95, 0
    %v119 = vsel %vm114, %v98, 0
    %v122 = vsel %vm114, %v99, 0
    %v125 = vsel %vm114, %v100, 0
    %v128 = vsel %vm114, %v101, 0
    %v131 = vsel %vm114, %v102, 0
    %v134 = vsel %vm114, %v103, 0
    %v137 = vsel %vm114, %v104, 0
    %v140 = vsel %vm114, %v105, 0
    %v143 = vsel %vm114, %v106, 0
    %v146 = vsel %vm114, %v107, 0
    %v149 = vsel %vm114, %v108, 0
    %v152 = vsel %vm114, %v109, 0
    %v155 = vsel %vm114, %v110, 0
    %v158 = vsel %vm114, %v111, 0
    %v161 = vsel %vm114, %v112, 0
    %v164 = vsel %vm114, %v113, 0
    %166 = vmatprep.subr.mxu0 0.0
    %167 = vmatpush1.xpose.msra.mxu0 %v119
    %168 = vmatprep.subr.mxu0 0.0
    %169 = vmatpush1.xpose.msra.mxu0 %v122
    %170 = vmatprep.subr.mxu0 0.0
    %171 = vmatpush1.xpose.msra.mxu0 %v125
    %172 = vmatprep.subr.mxu0 0.0
    %173 = vmatpush1.xpose.msra.mxu0 %v128
    %174 = vmatprep.subr.mxu0 0.0
    %175 = vmatpush1.xpose.msra.mxu0 %v131
    %176 = vmatprep.subr.mxu0 0.0
    %177 = vmatpush1.xpose.msra.mxu0 %v134
    %178 = vmatprep.subr.mxu0 0.0
    %179 = vmatpush1.xpose.msra.mxu0 %v137
    %180 = vmatprep.subr.mxu0 0.0
    %181 = vmatpush1.xpose.msra.mxu0 %v140
    %182 = vmatprep.subr.mxu0 0.0
    %183 = vmatpush1.xpose.msra.mxu0 %v143
    %184 = vmatprep.subr.mxu0 0.0
    %185 = vmatpush1.xpose.msra.mxu0 %v146
    %186 = vmatprep.subr.mxu0 0.0
    %187 = vmatpush1.xpose.msra.mxu0 %v149
    %188 = vmatprep.subr.mxu0 0.0
    %189 = vmatpush1.xpose.msra.mxu0 %v152
    %190 = vmatprep.subr.mxu0 0.0
    %191 = vmatpush1.xpose.msra.mxu0 %v155
    %192 = vmatprep.subr.mxu0 0.0
    %193 = vmatpush1.xpose.msra.mxu0 %v158
    %194 = vmatprep.subr.mxu0 0.0
    %195 = vmatpush1.xpose.msra.mxu0 %v161
    %196 = vmatprep.subr.mxu0 0.0
    %197 = vmatpush1.xpose.msra.mxu0 %v164
    %198 = vmatprep.subr.mxu0 0.0
    %199 = vmatpush1.xpose.msra.mxu0 0.0
    %200 = vmatprep.subr.mxu0 0.0
    %201 = vmatpush1.xpose.msra.mxu0 0.0
    %202 = vmatprep.subr.mxu0 0.0
    %203 = vmatpush1.xpose.msra.mxu0 0.0
    %204 = vmatprep.subr.mxu0 0.0
    %205 = vmatpush1.xpose.msra.mxu0 0.0
    %206 = vmatprep.subr.mxu0 0.0
    %207 = vmatpush1.xpose.msra.mxu0 0.0
    %208 = vmatprep.subr.mxu0 0.0
    %209 = vmatpush1.xpose.msra.mxu0 0.0
    %210 = vmatprep.subr.mxu0 0.0
    %211 = vmatpush1.xpose.msra.mxu0 0.0
    %212 = vmatprep.subr.mxu0 0.0
    %213 = vmatpush1.xpose.msra.mxu0 0.0
    %214 = vmatprep.subr.mxu0 0.0
    %215 = vmatpush1.xpose.msra.mxu0 0.0
    %216 = vmatprep.subr.mxu0 0.0
    %217 = vmatpush1.xpose.msra.mxu0 0.0
    %218 = vmatprep.subr.mxu0 0.0
    %219 = vmatpush1.xpose.msra.mxu0 0.0
    %220 = vmatprep.subr.mxu0 0.0
    %221 = vmatpush1.xpose.msra.mxu0 0.0
    %222 = vmatprep.subr.mxu0 0.0
    %223 = vmatpush1.xpose.msra.mxu0 0.0
    %224 = vmatprep.subr.mxu0 0.0
    %225 = vmatpush1.xpose.msra.mxu0 0.0
    %226 = vmatprep.subr.mxu0 0.0
    %227 = vmatpush1.xpose.msra.mxu0 0.0
    %228 = vmatprep.subr.mxu0 0.0
    %229 = vmatpush1.xpose.msra.mxu0 0.0
    %230 = vmatprep.mubr.f32.mxu0 0.0
    %231 = vmatmul.mubr.f32.gmra.mrb[0].mxu0 %v116
    %v232 = vpop.f32.mrb[0].mxu0
    %v233 = vadd.f32 0.0, %v232
    %v234 = vpop.f32.mrb[0].mxu0
    %235 = vdwg.mxu0
    %236 = vst [vmem:[#allocation2] sm:$0xff] %v233
    // Predicated region
    $region14: #{tpu_custom_call.1} parent=1 // pred_check
      _
    $region15: #{tpu_custom_call.1} parent=1 // pred_check_branch
      %238 = sbr.rel (0) target = $region17
    $region16: #{tpu_custom_call.1} parent=1 // pred_region
      %s240 = ssub.s32 128, 128
      %241 = vsyncadd [#allocation3], %s240
      %s243 = sshll.u32 [#allocation2], 4
      %s244 = int_to_ptr.vmem [resolvable:$true] %s243
      %246 = dma.vmem_to_hbm [thread:$0]  %s244, 128, %s3, [#allocation3]
    $region17: #{tpu_custom_call.1} parent=1 // pred_fallthru
      _
    // Predicated region
    $region18: #{tpu_custom_call.1} parent=1 // pred_check
      _
    $region19: #{tpu_custom_call.1} parent=1 // pred_check_branch
      %248 = sbr.rel (0) target = $region21
    $region20: #{tpu_custom_call.1} parent=1 // pred_region
      %249 = dma.done [#allocation3], 128
    $region21: #{tpu_custom_call.1} parent=1 // pred_fallthru
      _
    %250 = vsyncpa [#allocation3], 1

</llo_original>
